<compile_context>
chip_gen: v7x
topology: tpu7x:2x2x1
jax: 0.10.0
libtpu: 0.0.40
codegen_flags: <defaults>
</compile_context>

<pallas_src>
import math
from typing import NamedTuple

import jax
import jax.numpy as jnp
from jax.experimental import pallas as pl
from jax.experimental.pallas import tpu as pltpu


# ----------------------------- small host helpers -----------------------------

def _round_up(x, m):
    return (x + m - 1) // m * m


def _cdiv(a, b):
    return (a + b - 1) // b


def _vmem_capacity_bytes():
    try:
        return int(pltpu.get_tpu_info().vmem_capacity_bytes)
    except Exception:
        return 64 << 20          # conservative default (v7x: 64 MiB per TensorCore)


def _lane_align():
    # v6e / v7x MXU is 256 wide; older generations are 128 wide.
    try:
        kind = jax.devices()[0].device_kind.lower()
    except Exception:
        return 128
    return 256 if ("v6" in kind or "v7" in kind) else 128


def _pad_dim(n, align):
    if n < align:
        return _round_up(n, 128)
    return _round_up(n, align)


def _largest_divisor_tile(total, target, quantum=128):
    """Largest multiple of `quantum` that is <= target and divides `total`."""
    t = max(quantum, min(target, total))
    t = (t // quantum) * quantum
    while t > quantum and total % t != 0:
        t -= quantum
    return max(t, quantum)


# ----------------------------------- kernels -----------------------------------

def _ffn_fused_kernel(x_ref, w1_ref, b1_ref, w2_ref, b2_ref, o_ref):
    # x:(tm,d_p)  w1:(d_p,H_p)  b1:(1,H_p)f32  w2:(H_p,d_p)  b2:(1,d_p)f32  o:(tm,d_p)
    h = jnp.dot(x_ref[...], w1_ref[...], preferred_element_type=jnp.float32)
    h = jnp.maximum(h + b1_ref[...], 0.0)          # bias + ReLU in f32
    # dropout == identity (eval mode)
    y = jnp.dot(h.astype(w2_ref.dtype), w2_ref[...],
                preferred_element_type=jnp.float32)
    o_ref[...] = (y + b2_ref[...]).astype(o_ref.dtype)


def _ffn_tiled_kernel(x_ref, w1_ref, b1_ref, w2_ref, b2_ref, o_ref, acc_ref):
    # hidden dim tiled along grid axis 1; acc:(tm,d_p) f32 persists across it.
    j = pl.program_id(1)

    @pl.when(j == 0)
    def _():
        # Fold the output bias into the accumulator init (drops the finalize add).
        acc_ref[...] = jnp.broadcast_to(b2_ref[...], acc_ref.shape)

    h = jnp.dot(x_ref[...], w1_ref[...], preferred_element_type=jnp.float32)
    h = jnp.maximum(h + b1_ref[...], 0.0)
    # dropout == identity (eval mode)
    acc_ref[...] += jnp.dot(h.astype(w2_ref.dtype), w2_ref[...],
                            preferred_element_type=jnp.float32)

    @pl.when(j == pl.num_programs(1) - 1)
    def _():
        o_ref[...] = acc_ref[...].astype(o_ref.dtype)


# --------------------------- weight prep (hoist once) ---------------------------

class FFNParams(NamedTuple):
    w1p: jax.Array
    b1p: jax.Array
    w2p: jax.Array
    b2p: jax.Array
    d: int
    hidden: int
    d_p: int
    hidden_p: int
    compute_dtype: jnp.dtype


def prepare_ffn_params(w1, b1, w2, b2, *, compute_dtype=jnp.bfloat16, lane_align=None):
    """Pad + cast the FFN weights once (hoist this out of the per-call path).

    w1: (d, hidden)   b1: (hidden,) or (1, hidden)
    w2: (hidden, d)   b2: (d,)      or (1, d)
    Zero padding is exact for this FFN (padded rows/cols contribute 0).
    """
    d, hidden = w1.shape
    cd = jnp.dtype(compute_dtype)
    if lane_align is None:
        lane_align = _lane_align()
    d_p = _pad_dim(d, lane_align)
    hidden_p = _pad_dim(hidden, lane_align)

    def pad2(a, shape, dtype):
        a = jnp.asarray(a, dtype)
        if a.ndim == 1:
            a = a.reshape(1, -1)
        if a.shape == shape:
            return a
        return jnp.zeros(shape, dtype).at[:a.shape[0], :a.shape[1]].set(a)

    return FFNParams(
        w1p=pad2(w1, (d_p, hidden_p), cd),
        b1p=pad2(b1, (1, hidden_p), jnp.float32),
        w2p=pad2(w2, (hidden_p, d_p), cd),
        b2p=pad2(b2, (1, d_p), jnp.float32),
        d=d, hidden=hidden, d_p=d_p, hidden_p=hidden_p, compute_dtype=cd)


# ------------------------------------ wrapper ------------------------------------

def position_wise_ffn_prepared(x, params: FFNParams, *, tm=None, th=None,
                               vmem_budget_bytes=None):
    """Apply the FFN to x (..., d) using pre-padded params. Returns (..., d)."""
    d, hidden = params.d, params.hidden
    d_p, hidden_p = params.d_p, params.hidden_p
    cd = jnp.dtype(params.compute_dtype)
    assert x.shape[-1] == d, f"last dim {x.shape[-1]} != d={d}"

    out_dtype = x.dtype
    rows = int(math.prod(x.shape[:-1]))
    isz = cd.itemsize
    osz = jnp.dtype(out_dtype).itemsize
    sub = 8 if isz >= 4 else 16          # sublane granularity for the row tile
    tm_cap = 1024 if isz <= 2 else 512   # bf16 needs ~2x the rows for the same AI

    capacity = _vmem_capacity_bytes()
    budget = (vmem_budget_bytes if vmem_budget_bytes is not None
              else int(0.65 * capacity))

    # VMEM footprint estimates: include the h slab, its cast copy and f32 staging.
    # Weights are counted double-buffered (conservative; single-buffering only helps).
    def usage_fused(tm_):
        return (2 * tm_ * d_p * isz + 2 * tm_ * d_p * osz        # x / out tiles
                + 2 * 2 * d_p * hidden_p * isz                   # W1 + W2
                + 2 * (hidden_p + d_p) * 4                       # biases (f32)
                + tm_ * hidden_p * (4 + isz)                     # h f32 + cast copy
                + tm_ * d_p * 4)                                 # y f32 staging

    def usage_tiled(tm_, th_):
        return (tm_ * d_p * 4                                    # f32 accumulator
                + 2 * tm_ * d_p * isz + 2 * tm_ * d_p * osz      # x / out tiles
                + 2 * 2 * d_p * th_ * isz                        # W1 / W2 chunks
                + 2 * th_ * 4 + 2 * d_p * 4                      # biases
                + tm_ * th_ * (4 + isz))                         # h f32 + cast copy

    def shrink(t, floor):
        return max(floor, (t // 2 // sub) * sub)

    tm_sel = tm if tm is not None else min(tm_cap, _round_up(rows, sub))
    tm_sel = max(sub, (tm_sel // sub) * sub)
    th_sel = hidden_p

    if th is not None and th < hidden_p:
        mode = "tiled"
        th_sel = _largest_divisor_tile(hidden_p, th)
        while usage_tiled(tm_sel, th_sel) > budget and tm_sel > sub:
            tm_sel = shrink(tm_sel, sub)
    else:
        # Prefer the collapsed-hidden structure: weights stream from HBM once.
        while usage_fused(tm_sel) > budget and tm_sel > sub:
            tm_sel = shrink(tm_sel, sub)
        if usage_fused(tm_sel) <= budget:
            mode = "fused"
        else:
            # Weights too large for VMEM: tile the hidden dim. Shrink tm before th so
            # th stays >= 512 as long as possible (fewer accumulator RMW passes).
            mode = "tiled"
            tm_sel = tm if tm is not None else min(tm_cap, _round_up(rows, sub))
            tm_sel = max(sub, (tm_sel // sub) * sub)
            th_sel = _largest_divisor_tile(hidden_p, 512)
            while usage_tiled(tm_sel, th_sel) > budget and tm_sel > 256:
                tm_sel = shrink(tm_sel, 256)
            while usage_tiled(tm_sel, th_sel) > budget and th_sel > 128:
                th_sel = _largest_divisor_tile(hidden_p, max(128, th_sel // 2))
            while usage_tiled(tm_sel, th_sel) > budget and tm_sel > sub:
                tm_sel = shrink(tm_sel, sub)

    # Minimize row-padding waste: split rows evenly across the row tiles.
    n_row_tiles = max(1, _cdiv(rows, tm_sel))
    tm_sel = min(tm_sel, _round_up(_cdiv(rows, n_row_tiles), sub))
    rows_p = n_row_tiles * tm_sel

    # ---- prepare x: pad / cast only when actually needed (zero padding is exact) ----
    x2d = x.reshape(rows, d)
    if x2d.dtype != cd:
        x2d = x2d.astype(cd)
    if rows_p != rows or d_p != d:
        xp = jnp.zeros((rows_p, d_p), cd).at[:rows, :d].set(x2d)
    else:
        xp = x2d

    usage = usage_fused(tm_sel) if mode == "fused" else usage_tiled(tm_sel, th_sel)
    vmem_limit = int(min(int(0.85 * capacity), usage + (8 << 20)))
    vmem_limit = max(vmem_limit, 16 << 20)

    weight_passes = 1 if mode == "fused" else n_row_tiles
    cost = pl.CostEstimate(
        flops=4 * rows_p * d_p * hidden_p,                       # two matmuls, 2*M*N*K
        transcendentals=0,
        bytes_accessed=(rows_p * d_p * (isz + osz)
                        + weight_passes * (2 * d_p * hidden_p * isz + hidden_p * 4)
                        + d_p * 4),
    )
    out_shape = jax.ShapeDtypeStruct((rows_p, d_p), out_dtype)

    def launch(single_buffer_consts):
        def const_spec(shape, imap):
            # Constant-index blocks are fetched once and never re-fetched: no need
            # for the default double buffer.
            if single_buffer_consts and hasattr(pl, "Buffered"):
                return pl.BlockSpec(shape, imap, pipeline_mode=pl.Buffered(1))
            return pl.BlockSpec(shape, imap)

        if mode == "fused":
            grid_spec = pltpu.PrefetchScalarGridSpec(
                num_scalar_prefetch=0,
                grid=(rows_p // tm_sel,),
                in_specs=[
                    pl.BlockSpec((tm_sel, d_p), lambda i: (i, 0)),      # x row tile
                    const_spec((d_p, hidden_p), lambda i: (0, 0)),      # W1 (resident)
                    const_spec((1, hidden_p), lambda i: (0, 0)),        # b1
                    const_spec((hidden_p, d_p), lambda i: (0, 0)),      # W2 (resident)
                    const_spec((1, d_p), lambda i: (0, 0)),             # b2
                ],
                out_specs=pl.BlockSpec((tm_sel, d_p), lambda i: (i, 0)),
                scratch_shapes=[],
            )
            kernel, dims = _ffn_fused_kernel, ("parallel",)
        else:
            grid_spec = pltpu.PrefetchScalarGridSpec(
                num_scalar_prefetch=0,
                grid=(rows_p // tm_sel, hidden_p // th_sel),
                in_specs=[
                    pl.BlockSpec((tm_sel, d_p), lambda i, j: (i, 0)),   # x row tile
                    pl.BlockSpec((d_p, th_sel), lambda i, j: (0, j)),   # W1 chunk
                    pl.BlockSpec((1, th_sel), lambda i, j: (0, j)),     # b1 chunk
                    pl.BlockSpec((th_sel, d_p), lambda i, j: (j, 0)),   # W2 chunk
                    const_spec((1, d_p), lambda i, j: (0, 0)),          # b2
                ],
                out_specs=pl.BlockSpec((tm_sel, d_p), lambda i, j: (i, 0)),
                scratch_shapes=[pltpu.VMEM((tm_sel, d_p), jnp.float32)],
            )
            kernel, dims = _ffn_tiled_kernel, ("parallel", "arbitrary")

        return pl.pallas_call(
            kernel,
            out_shape=out_shape,
            grid_spec=grid_spec,
            compiler_params=pltpu.CompilerParams(
                dimension_semantics=dims,
                vmem_limit_bytes=vmem_limit,
            ),
            cost_estimate=cost,
        )(xp, params.w1p, params.b1p, params.w2p, params.b2p)

    try:
        out2d = launch(True)
    except Exception:
        # pipeline_mode=pl.Buffered(1) unsupported on this jax build → default buffering.
        out2d = launch(False)

    if rows_p != rows or d_p != d:
        out2d = out2d[:rows, :d]
    return out2d.reshape(x.shape[:-1] + (d,))


def position_wise_ffn(x, w1, b1, w2, b2, *, compute_dtype=jnp.bfloat16,
                      tm=None, th=None, vmem_budget_bytes=None):
    """One-shot helper (pads/casts weights per call). For repeated calls with the same
    weights, use prepare_ffn_params() once + position_wise_ffn_prepared()."""
    params = prepare_ffn_params(w1, b1, w2, b2, compute_dtype=compute_dtype)
    return position_wise_ffn_prepared(x, params, tm=tm, th=th,
                                      vmem_budget_bytes=vmem_budget_bytes)


def ffn_reference(x, w1, b1, w2, b2):
    h = jnp.maximum(x @ w1 + b1.reshape(-1), 0.0)
    return h @ w2 + b2.reshape(-1)


# ------------------------------------- tests -------------------------------------

if __name__ == "__main__":
    def make_inputs(key, B, S, d, hidden):
        kx, kw1, kb1, kw2, kb2 = jax.random.split(key, 5)
        x = jax.random.normal(kx, (B, S, d), dtype=jnp.float32)
        lim1 = 1.0 / (d ** 0.5)
        lim2 = 1.0 / (hidden ** 0.5)
        w1 = jax.random.uniform(kw1, (d, hidden), jnp.float32, -lim1, lim1)
        b1 = jax.random.uniform(kb1, (1, hidden), jnp.float32, -lim1, lim1)
        w2 = jax.random.uniform(kw2, (hidden, d), jnp.float32, -lim2, lim2)
        b2 = jax.random.uniform(kb2, (1, d), jnp.float32, -lim2, lim2)
        return x, w1, b1, w2, b2

    # Test 1: small module-consistent shapes, default bf16 compute (fused structure).
    B, S, d, hidden = 2, 8, 32, 64
    x, w1, b1, w2, b2 = make_inputs(jax.random.PRNGKey(0), B, S, d, hidden)
    out = jax.block_until_ready(position_wise_ffn(x, w1, b1, w2, b2))
    ref = ffn_reference(x, w1, b1, w2, b2)
    assert out.shape == (B, S, d)
    assert jnp.allclose(out, ref, atol=2e-2, rtol=2e-2), "mismatch vs reference (test 1)"

    # Test 2: f32 compute with forced small tiles to exercise the hidden-tiled
    # accumulation path (grid = 4 row tiles x 4 hidden chunks).
    B2, S2, d2, hidden2 = 2, 64, 128, 512
    x2, w12, b12, w22, b22 = make_inputs(jax.random.PRNGKey(1), B2, S2, d2, hidden2)
    out2 = jax.block_until_ready(
        position_wise_ffn(x2, w12, b12, w22, b22, compute_dtype=jnp.float32,
                          tm=32, th=128))
    ref2 = ffn_reference(x2, w12, b12, w22, b22)
    assert out2.shape == (B2, S2, d2)
    assert jnp.allclose(out2, ref2, atol=1e-4, rtol=1e-4), "mismatch vs reference (test 2)"

    # Test 3: hoisted weight prep (prepare once, reuse) with auto tiles
    # (fused structure: weights resident, streamed from HBM once).
    params = prepare_ffn_params(w12, b12, w22, b22, compute_dtype=jnp.float32)
    out3a = position_wise_ffn_prepared(x2, params)
    out3b = jax.block_until_ready(position_wise_ffn_prepared(x2 * 0.5, params))
    ref3b = ffn_reference(x2 * 0.5, w12, b12, w22, b22)
    assert jnp.allclose(out3a, ref2, atol=1e-4, rtol=1e-4), "mismatch vs reference (test 3a)"
    assert jnp.allclose(out3b, ref3b, atol=1e-4, rtol=1e-4), "mismatch vs reference (test 3b)"

    print("KERNEL_OK")
</pallas_src>

<mosaic_0001>
module attributes {stable_mosaic.version = 11 : i64} {
  func.func @_ffn_fused_kernel(%arg0: i32, %arg1: memref<16x128xbf16, #tpu.memory_space<vmem>>, %arg2: memref<128x128xbf16, #tpu.memory_space<vmem>>, %arg3: memref<1x128xf32, #tpu.memory_space<vmem>>, %arg4: memref<128x128xbf16, #tpu.memory_space<vmem>>, %arg5: memref<1x128xf32, #tpu.memory_space<vmem>>, %arg6: memref<16x128xf32, #tpu.memory_space<vmem>>) attributes {dimension_semantics = [#tpu.dimension_semantics<parallel>], iteration_bounds = array<i64: 1>, scalar_prefetch = 0 : i64, scratch_operands = 0 : i64, tpu.core_type = #tpu.core_type<tc>, window_params = [{transform_indices = @transform_0, window_bounds = array<i64: 16, 128>}, {pipeline_mode = #tpu.pipeline_mode<synchronous>, transform_indices = @transform_1, window_bounds = array<i64: 128, 128>}, {pipeline_mode = #tpu.pipeline_mode<synchronous>, transform_indices = @transform_2, window_bounds = array<i64: 1, 128>}, {pipeline_mode = #tpu.pipeline_mode<synchronous>, transform_indices = @transform_3, window_bounds = array<i64: 128, 128>}, {pipeline_mode = #tpu.pipeline_mode<synchronous>, transform_indices = @transform_4, window_bounds = array<i64: 1, 128>}, {transform_indices = @transform_5, window_bounds = array<i64: 16, 128>}]} {
    %c0 = arith.constant 0 : index
    %c0_0 = arith.constant 0 : index
    %0 = vector.load %arg1[%c0, %c0_0] : memref<16x128xbf16, #tpu.memory_space<vmem>>, vector<16x128xbf16>
    %c0_1 = arith.constant 0 : index
    %c0_2 = arith.constant 0 : index
    %1 = vector.load %arg2[%c0_1, %c0_2] : memref<128x128xbf16, #tpu.memory_space<vmem>>, vector<128x128xbf16>
    %cst = arith.constant dense<0.000000e+00> : vector<16x128xf32>
    %2 = tpu.matmul %0, %1, %cst {dimension_numbers = #tpu.dot_dimension_numbers<[1], [0], [0], [1], [0, 0, 1, 1], [], []>} : vector<16x128xbf16>, vector<128x128xbf16>, vector<16x128xf32> -> vector<16x128xf32>
    %c0_3 = arith.constant 0 : index
    %c0_4 = arith.constant 0 : index
    %3 = vector.load %arg3[%c0_3, %c0_4] : memref<1x128xf32, #tpu.memory_space<vmem>>, vector<1x128xf32>
    %4 = vector.broadcast %3 : vector<1x128xf32> to vector<16x128xf32>
    %5 = arith.addf %2, %4 : vector<16x128xf32>
    %cst_5 = arith.constant 0.000000e+00 : f32
    %6 = vector.broadcast %cst_5 : f32 to vector<16x128xf32>
    %7 = arith.maximumf %5, %6 : vector<16x128xf32>
    %8 = arith.truncf %7 : vector<16x128xf32> to vector<16x128xbf16>
    %c0_6 = arith.constant 0 : index
    %c0_7 = arith.constant 0 : index
    %9 = vector.load %arg4[%c0_6, %c0_7] : memref<128x128xbf16, #tpu.memory_space<vmem>>, vector<128x128xbf16>
    %cst_8 = arith.constant dense<0.000000e+00> : vector<16x128xf32>
    %10 = tpu.matmul %8, %9, %cst_8 {dimension_numbers = #tpu.dot_dimension_numbers<[1], [0], [0], [1], [0, 0, 1, 1], [], []>} : vector<16x128xbf16>, vector<128x128xbf16>, vector<16x128xf32> -> vector<16x128xf32>
    %c0_9 = arith.constant 0 : index
    %c0_10 = arith.constant 0 : index
    %11 = vector.load %arg5[%c0_9, %c0_10] : memref<1x128xf32, #tpu.memory_space<vmem>>, vector<1x128xf32>
    %12 = vector.broadcast %11 : vector<1x128xf32> to vector<16x128xf32>
    %13 = arith.addf %10, %12 : vector<16x128xf32>
    %c0_11 = arith.constant 0 : index
    %c0_12 = arith.constant 0 : index
    %14 = vector.load %arg6[%c0_11, %c0_12] : memref<16x128xf32, #tpu.memory_space<vmem>>, vector<16x128xf32>
    tpu.vector_store %arg6[%c0_11, %c0_12], %13 {strides = array<i32>} : memref<16x128xf32, #tpu.memory_space<vmem>>, vector<16x128xf32>,
    return
  }
  func.func @transform_0(%arg0: i32) -> (i32, i32) {
    %c0_i32 = arith.constant 0 : i32
    %c0_i32_0 = arith.constant 0 : i32
    return %arg0, %c0_i32 : i32, i32
  }
  func.func @transform_1(%arg0: i32) -> (i32, i32) {
    %c0_i32 = arith.constant 0 : i32
    %c0_i32_0 = arith.constant 0 : i32
    %c0_i32_1 = arith.constant 0 : i32
    return %c0_i32, %c0_i32_0 : i32, i32
  }
  func.func @transform_2(%arg0: i32) -> (i32, i32) {
    %c0_i32 = arith.constant 0 : i32
    %c0_i32_0 = arith.constant 0 : i32
    %c0_i32_1 = arith.constant 0 : i32
    return %c0_i32, %c0_i32_0 : i32, i32
  }
  func.func @transform_3(%arg0: i32) -> (i32, i32) {
    %c0_i32 = arith.constant 0 : i32
    %c0_i32_0 = arith.constant 0 : i32
    %c0_i32_1 = arith.constant 0 : i32
    return %c0_i32, %c0_i32_0 : i32, i32
  }
  func.func @transform_4(%arg0: i32) -> (i32, i32) {
    %c0_i32 = arith.constant 0 : i32
    %c0_i32_0 = arith.constant 0 : i32
    %c0_i32_1 = arith.constant 0 : i32
    return %c0_i32, %c0_i32_0 : i32, i32
  }
  func.func @transform_5(%arg0: i32) -> (i32, i32) {
    %c0_i32 = arith.constant 0 : i32
    %c0_i32_0 = arith.constant 0 : i32
    return %arg0, %c0_i32 : i32, i32
  }
}

module attributes {stable_mosaic.version = 11 : i64} {
  func.func @_ffn_fused_kernel(%arg0: i32, %arg1: memref<16x128xbf16, #tpu.memory_space<vmem>>, %arg2: memref<128x128xbf16, #tpu.memory_space<vmem>>, %arg3: memref<1x128xf32, #tpu.memory_space<vmem>>, %arg4: memref<128x128xbf16, #tpu.memory_space<vmem>>, %arg5: memref<1x128xf32, #tpu.memory_space<vmem>>, %arg6: memref<16x128xf32, #tpu.memory_space<vmem>>) attributes {dimension_semantics = [#tpu.dimension_semantics<parallel>], iteration_bounds = array<i64: 1>, scalar_prefetch = 0 : i64, scratch_operands = 0 : i64, tpu.core_type = #tpu.core_type<tc>, window_params = [{transform_indices = @transform_0, window_bounds = array<i64: 16, 128>}, {pipeline_mode = #tpu.pipeline_mode<synchronous>, transform_indices = @transform_1, window_bounds = array<i64: 128, 128>}, {pipeline_mode = #tpu.pipeline_mode<synchronous>, transform_indices = @transform_2, window_bounds = array<i64: 1, 128>}, {pipeline_mode = #tpu.pipeline_mode<synchronous>, transform_indices = @transform_3, window_bounds = array<i64: 128, 128>}, {pipeline_mode = #tpu.pipeline_mode<synchronous>, transform_indices = @transform_4, window_bounds = array<i64: 1, 128>}, {transform_indices = @transform_5, window_bounds = array<i64: 16, 128>}]} {
    %c0 = arith.constant 0 : index
    %c0_0 = arith.constant 0 : index
    %0 = vector.load %arg1[%c0, %c0_0] : memref<16x128xbf16, #tpu.memory_space<vmem>>, vector<16x128xbf16>
    %c0_1 = arith.constant 0 : index
    %c0_2 = arith.constant 0 : index
    %1 = vector.load %arg2[%c0_1, %c0_2] : memref<128x128xbf16, #tpu.memory_space<vmem>>, vector<128x128xbf16>
    %cst = arith.constant dense<0.000000e+00> : vector<16x128xf32>
    %2 = tpu.matmul %0, %1, %cst {dimension_numbers = #tpu.dot_dimension_numbers<[1], [0], [0], [1], [0, 0, 1, 1], [], []>} : vector<16x128xbf16>, vector<128x128xbf16>, vector<16x128xf32> -> vector<16x128xf32>
    %c0_3 = arith.constant 0 : index
    %c0_4 = arith.constant 0 : index
    %3 = vector.load %arg3[%c0_3, %c0_4] : memref<1x128xf32, #tpu.memory_space<vmem>>, vector<1x128xf32>
    %4 = vector.broadcast %3 : vector<1x128xf32> to vector<16x128xf32>
    %5 = arith.addf %2, %4 : vector<16x128xf32>
    %cst_5 = arith.constant 0.000000e+00 : f32
    %6 = vector.broadcast %cst_5 : f32 to vector<16x128xf32>
    %7 = arith.maximumf %5, %6 : vector<16x128xf32>
    %8 = arith.truncf %7 : vector<16x128xf32> to vector<16x128xbf16>
    %c0_6 = arith.constant 0 : index
    %c0_7 = arith.constant 0 : index
    %9 = vector.load %arg4[%c0_6, %c0_7] : memref<128x128xbf16, #tpu.memory_space<vmem>>, vector<128x128xbf16>
    %cst_8 = arith.constant dense<0.000000e+00> : vector<16x128xf32>
    %10 = tpu.matmul %8, %9, %cst_8 {dimension_numbers = #tpu.dot_dimension_numbers<[1], [0], [0], [1], [0, 0, 1, 1], [], []>} : vector<16x128xbf16>, vector<128x128xbf16>, vector<16x128xf32> -> vector<16x128xf32>
    %c0_9 = arith.constant 0 : index
    %c0_10 = arith.constant 0 : index
    %11 = vector.load %arg5[%c0_9, %c0_10] : memref<1x128xf32, #tpu.memory_space<vmem>>, vector<1x128xf32>
    %12 = vector.broadcast %11 : vector<1x128xf32> to vector<16x128xf32>
    %13 = arith.addf %10, %12 : vector<16x128xf32>
    %c0_11 = arith.constant 0 : index
    %c0_12 = arith.constant 0 : index
    %14 = vector.load %arg6[%c0_11, %c0_12] : memref<16x128xf32, #tpu.memory_space<vmem>>, vector<16x128xf32>
    tpu.vector_store %arg6[%c0_11, %c0_12], %13 {strides = array<i32>} : memref<16x128xf32, #tpu.memory_space<vmem>>, vector<16x128xf32>,
    return
  }
  func.func @transform_0(%arg0: i32) -> (i32, i32) {
    %c0_i32 = arith.constant 0 : i32
    %c0_i32_0 = arith.constant 0 : i32
    return %arg0, %c0_i32 : i32, i32
  }
  func.func @transform_1(%arg0: i32) -> (i32, i32) {
    %c0_i32 = arith.constant 0 : i32
    %c0_i32_0 = arith.constant 0 : i32
    %c0_i32_1 = arith.constant 0 : i32
    return %c0_i32, %c0_i32_0 : i32, i32
  }
  func.func @transform_2(%arg0: i32) -> (i32, i32) {
    %c0_i32 = arith.constant 0 : i32
    %c0_i32_0 = arith.constant 0 : i32
    %c0_i32_1 = arith.constant 0 : i32
    return %c0_i32, %c0_i32_0 : i32, i32
  }
  func.func @transform_3(%arg0: i32) -> (i32, i32) {
    %c0_i32 = arith.constant 0 : i32
    %c0_i32_0 = arith.constant 0 : i32
    %c0_i32_1 = arith.constant 0 : i32
    return %c0_i32, %c0_i32_0 : i32, i32
  }
  func.func @transform_4(%arg0: i32) -> (i32, i32) {
    %c0_i32 = arith.constant 0 : i32
    %c0_i32_0 = arith.constant 0 : i32
    %c0_i32_1 = arith.constant 0 : i32
    return %c0_i32, %c0_i32_0 : i32, i32
  }
  func.func @transform_5(%arg0: i32) -> (i32, i32) {
    %c0_i32 = arith.constant 0 : i32
    %c0_i32_0 = arith.constant 0 : i32
    return %arg0, %c0_i32 : i32, i32
  }
}

</mosaic_0001>

<llo_original>
// kernel: tpu_custom_call.1
$region0: #{tpu_custom_call.1}
  #allocation0 [shape = 'u32[]', space=smem, size = 0x4, offset = 0x4, fixed_abs, tag = 'smem constant byte address 0x4 - core index']
  #allocation1 [shape = 'u32[144,128]{1,0:T(1,128)}', space=vmem, size = 0x12000, scoped, tag = 'internal scratch']
  %s0 = inlined_call_operand.hbm [shape: bf16[16,128], index: 0, kind: input, shape index: {}]
  %s1 = inlined_call_operand.hbm [shape: bf16[128,128], index: 1, kind: input, shape index: {}]
  %s2 = inlined_call_operand.vmem [shape: f32[1,128], index: 2, kind: input, shape index: {}]
  %s3 = inlined_call_operand.hbm [shape: bf16[128,128], index: 3, kind: input, shape index: {}]
  %s4 = inlined_call_operand.vmem [shape: f32[1,128], index: 4, kind: input, shape index: {}]
  %s5 = inlined_call_operand.hbm [shape: f32[16,128], index: 5, kind: output, shape index: {}]
  %s6 = sld [smem:[#allocation0]]
  $region42: #{tpu_custom_call.1} parent=0
    _
  %s8 = ssub.s32 1, %s6
  %s9 = scalar_select 0, %s8, %s6
  $region1: #{tpu_custom_call.1} parent=0
    #allocation2 [shape = 'u8[4096]{0}', space=vmem, size = 0x1000, scoped, tag = 'input window, operand 0, single buffered']
    #allocation3 [shape = 's32[1]{0}', space=sflag, size = 0x4, scoped, tag = 'scoped memory for tpu_custom_call.1']
    #allocation4 [shape = 's32[1]{0}', space=sflag, size = 0x4, scoped, tag = 'scoped memory for tpu_custom_call.1']
    #allocation5 [shape = 'u8[32768]{0}', space=vmem, size = 0x8000, scoped, tag = 'input window, operand 1, single buffered']
    #allocation6 [shape = 's32[1]{0}', space=sflag, size = 0x4, scoped, tag = 'scoped memory for tpu_custom_call.1']
    #allocation7 [shape = 'u8[32768]{0}', space=vmem, size = 0x8000, scoped, tag = 'input window, operand 3, single buffered']
    #allocation8 [shape = 'u8[8192]{0}', space=vmem, size = 0x2000, scoped, tag = 'output window, operand 0, single buffered']
    %10 = vsyncpa [#allocation3], 0
    %11 = vsyncpa [#allocation6], 0
    %12 = vsyncpa [#allocation4], 0
    // Predicated region
    $region2: #{tpu_custom_call.1} parent=1 // pred_check
      _
    $region3: #{tpu_custom_call.1} parent=1 // pred_check_branch
      %14 = sbr.rel (0) target = $region5
    $region4: #{tpu_custom_call.1} parent=1 // pred_region
      %s16 = ssub.s32 128, 128
      %17 = vsyncadd [#allocation3], %s16
      %s18 = sshll.u32 [#allocation2], 4
      %s19 = int_to_ptr.vmem [resolvable:$true] %s18
      %24 = dma.hbm_to_vmem [thread:$0]  %s0, 128, %s19, [#allocation3], 64, 64, 4
    $region5: #{tpu_custom_call.1} parent=1 // pred_fallthru
      _
    // Predicated region
    $region6: #{tpu_custom_call.1} parent=1 // pred_check
      _
    $region7: #{tpu_custom_call.1} parent=1 // pred_check_branch
      %26 = sbr.rel (0) target = $region9
    $region8: #{tpu_custom_call.1} parent=1 // pred_region
      %s28 = ssub.s32 1024, 1024
      %29 = vsyncadd [#allocation6], %s28
      %s30 = sshll.u32 [#allocation5], 4
      %s31 = int_to_ptr.vmem [resolvable:$true] %s30
      %36 = dma.hbm_to_vmem [thread:$0]  %s1, 1024, %s31, [#allocation6], 64, 64, 4
    $region9: #{tpu_custom_call.1} parent=1 // pred_fallthru
      _
    // Predicated region
    $region10: #{tpu_custom_call.1} parent=1 // pred_check
      _
    $region11: #{tpu_custom_call.1} parent=1 // pred_check_branch
      %38 = sbr.rel (0) target = $region13
    $region12: #{tpu_custom_call.1} parent=1 // pred_region
      _
    $region13: #{tpu_custom_call.1} parent=1 // pred_fallthru
      _
    // Predicated region
    $region14: #{tpu_custom_call.1} parent=1 // pred_check
      _
    $region15: #{tpu_custom_call.1} parent=1 // pred_check_branch
      %40 = sbr.rel (0) target = $region17
    $region16: #{tpu_custom_call.1} parent=1 // pred_region
      %s42 = ssub.s32 1024, 1024
      %43 = vsyncadd [#allocation6], %s42
      %s44 = sshll.u32 [#allocation7], 4
      %s45 = int_to_ptr.vmem [resolvable:$true] %s44
      %50 = dma.hbm_to_vmem [thread:$0]  %s3, 1024, %s45, [#allocation6], 64, 64, 4
    $region17: #{tpu_custom_call.1} parent=1 // pred_fallthru
      _
    // Predicated region
    $region18: #{tpu_custom_call.1} parent=1 // pred_check
      _
    $region19: #{tpu_custom_call.1} parent=1 // pred_check_branch
      %52 = sbr.rel (0) target = $region21
    $region20: #{tpu_custom_call.1} parent=1 // pred_region
      _
    $region21: #{tpu_custom_call.1} parent=1 // pred_fallthru
      _
    // Predicated region
    $region22: #{tpu_custom_call.1} parent=1 // pred_check
      _
    $region23: #{tpu_custom_call.1} parent=1 // pred_check_branch
      %54 = sbr.rel (0) target = $region25
    $region24: #{tpu_custom_call.1} parent=1 // pred_region
      %55 = dma.done [#allocation3], 128
    $region25: #{tpu_custom_call.1} parent=1 // pred_fallthru
      _
    // Predicated region
    $region26: #{tpu_custom_call.1} parent=1 // pred_check
      _
    $region27: #{tpu_custom_call.1} parent=1 // pred_check_branch
      %57 = sbr.rel (0) target = $region29
    $region28: #{tpu_custom_call.1} parent=1 // pred_region
      %58 = dma.done [#allocation6], 1024
    $region29: #{tpu_custom_call.1} parent=1 // pred_fallthru
      _
    // Predicated region
    $region30: #{tpu_custom_call.1} parent=1 // pred_check
      _
    $region31: #{tpu_custom_call.1} parent=1 // pred_check_branch
      %60 = sbr.rel (0) target = $region33
    $region32: #{tpu_custom_call.1} parent=1 // pred_region
      %61 = dma.done [#allocation6], 1024
    $region33: #{tpu_custom_call.1} parent=1 // pred_fallthru
      _
    %v63 = vld [vmem:[#allocation2] sm:$0xf]
    %v64 = vld [vmem:[#allocation2 + $0x4] sm:$0xf]
    %v65 = vld [vmem:[#allocation5] sm:$0xf]
    %v66 = vld [vmem:[#allocation5 + $0x4] sm:$0xf]
    %v67 = vld [vmem:[#allocation5 + $0x8] sm:$0xf]
    %v68 = vld [vmem:[#allocation5 + $0xc] sm:$0xf]
    %v69 = vld [vmem:[#allocation5 + $0x10] sm:$0xf]
    %v70 = vld [vmem:[#allocation5 + $0x14] sm:$0xf]
    %v71 = vld [vmem:[#allocation5 + $0x18] sm:$0xf]
    %v72 = vld [vmem:[#allocation5 + $0x1c] sm:$0xf]
    %v73 = vld [vmem:[#allocation5 + $0x20] sm:$0xf]
    %v74 = vld [vmem:[#allocation5 + $0x24] sm:$0xf]
    %v75 = vld [vmem:[#allocation5 + $0x28] sm:$0xf]
    %v76 = vld [vmem:[#allocation5 + $0x2c] sm:$0xf]
    %v77 = vld [vmem:[#allocation5 + $0x30] sm:$0xf]
    %v78 = vld [vmem:[#allocation5 + $0x34] sm:$0xf]
    %v79 = vld [vmem:[#allocation5 + $0x38] sm:$0xf]
    %v80 = vld [vmem:[#allocation5 + $0x3c] sm:$0xf]
    %v81 = vld [vmem:[%s2] sm:$0x1]
    %v83 = vlaneseq
    %v84 = vshrl.u32 %v83, 7
    %v85 = vsub.s32 0, %v84
    %v86 = vrot.slane %v81, %v85
    %v90 = vunpack.c.l.b16 %v63
    %v91 = vunpack.c.l.b16 %v64
    %v92 = vpack.c.b16 %v91, %v90
    %v110 = vunpack.c.l.b16 %v65
    %v111 = vunpack.c.l.b16 %v66
    %v112 = vunpack.c.l.b16 %v67
    %v113 = vunpack.c.l.b16 %v68
    %v114 = vunpack.c.l.b16 %v69
    %v115 = vunpack.c.l.b16 %v70
    %v116 = vunpack.c.l.b16 %v71
    %v117 = vunpack.c.l.b16 %v72
    %v118 = vunpack.c.l.b16 %v73
    %v119 = vunpack.c.l.b16 %v74
    %v120 = vunpack.c.l.b16 %v75
    %v121 = vunpack.c.l.b16 %v76
    %v122 = vunpack.c.l.b16 %v77
    %v123 = vunpack.c.l.b16 %v78
    %v124 = vunpack.c.l.b16 %v79
    %v125 = vunpack.c.l.b16 %v80
    %v126 = vpack.c.b16 %v111, %v110
    %v127 = vpack.c.b16 %v113, %v112
    %v128 = vpack.c.b16 %v115, %v114
    %v129 = vpack.c.b16 %v117, %v116
    %v130 = vpack.c.b16 %v119, %v118
    %v131 = vpack.c.b16 %v121, %v120
    %v132 = vpack.c.b16 %v123, %v122
    %v133 = vpack.c.b16 %v125, %v124
    %142 = vmatprep.subr.bf16.mxu0 0
    %143 = vmatpush1.bf16.msra.mxu0 %v126
    %144 = vmatprep.subr.bf16.mxu0 0
    %145 = vmatpush1.bf16.msra.mxu0 %v127
    %146 = vmatprep.subr.bf16.mxu0 0
    %147 = vmatpush1.bf16.msra.mxu0 %v128
    %148 = vmatprep.subr.bf16.mxu0 0
    %149 = vmatpush1.bf16.msra.mxu0 %v129
    %150 = vmatprep.subr.bf16.mxu0 0
    %151 = vmatpush1.bf16.msra.mxu0 %v130
    %152 = vmatprep.subr.bf16.mxu0 0
    %153 = vmatpush1.bf16.msra.mxu0 %v131
    %154 = vmatprep.subr.bf16.mxu0 0
    %155 = vmatpush1.bf16.msra.mxu0 %v132
    %156 = vmatprep.subr.bf16.mxu0 0
    %157 = vmatpush1.bf16.msra.mxu0 %v133
    %158 = vmatprep.subr.bf16.mxu0 0
    %159 = vmatpush1.bf16.msra.mxu0 0
    %160 = vmatprep.subr.bf16.mxu0 0
    %161 = vmatpush1.bf16.msra.mxu0 0
    %162 = vmatprep.subr.bf16.mxu0 0
    %163 = vmatpush1.bf16.msra.mxu0 0
    %164 = vmatprep.subr.bf16.mxu0 0
    %165 = vmatpush1.bf16.msra.mxu0 0
    %166 = vmatprep.subr.bf16.mxu0 0
    %167 = vmatpush1.bf16.msra.mxu0 0
    %168 = vmatprep.subr.bf16.mxu0 0
    %169 = vmatpush1.bf16.msra.mxu0 0
    %170 = vmatprep.subr.bf16.mxu0 0
    %171 = vmatpush1.bf16.msra.mxu0 0
    %172 = vmatprep.subr.bf16.mxu0 0
    %173 = vmatpush1.bf16.msra.mxu0 0
    %174 = vmatprep.mubr.bf16.mxu0 0
    %175 = vmatmul.mubr.bf16.gmra.mrb[0].mxu0 %v92
    %v176 = vpop.f32.mrb[0].mxu0
    %v177 = vadd.f32 %v86, %v176
    %v178 = vpop.f32.mrb[0].mxu0
    %v179 = vpop.f32.mrb[0].mxu0
    %v180 = vadd.f32 %v86, %v179
    %v181 = vpop.f32.mrb[0].mxu0
    %182 = vdwg.mxu0
    %v183 = vmax.f32 %v177, 0.0
    %v184 = vmax.f32 %v180, 0.0
    %v185 = vpack.c.bf16 %v184, %v183
    %v186 = vld [vmem:[#allocation7] sm:$0xf]
    %v187 = vld [vmem:[#allocation7 + $0x4] sm:$0xf]
    %v188 = vld [vmem:[#allocation7 + $0x8] sm:$0xf]
    %v189 = vld [vmem:[#allocation7 + $0xc] sm:$0xf]
    %v190 = vld [vmem:[#allocation7 + $0x10] sm:$0xf]
    %v191 = vld [vmem:[#allocation7 + $0x14] sm:$0xf]
    %v192 = vld [vmem:[#allocation7 + $0x18] sm:$0xf]
    %v193 = vld [vmem:[#allocation7 + $0x1c] sm:$0xf]
    %v194 = vld [vmem:[#allocation7 + $0x20] sm:$0xf]
    %v195 = vld [vmem:[#allocation7 + $0x24] sm:$0xf]
    %v196 = vld [vmem:[#allocation7 + $0x28] sm:$0xf]
    %v197 = vld [vmem:[#allocation7 + $0x2c] sm:$0xf]
    %v198 = vld [vmem:[#allocation7 + $0x30] sm:$0xf]
    %v199 = vld [vmem:[#allocation7 + $0x34] sm:$0xf]
    %v200 = vld [vmem:[#allocation7 + $0x38] sm:$0xf]
    %v201 = vld [vmem:[#allocation7 + $0x3c] sm:$0xf]
    %v202 = vld [vmem:[%s4] sm:$0x1]
    %v204 = vlaneseq
    %v205 = vshrl.u32 %v204, 7
    %v206 = vsub.s32 0, %v205
    %v207 = vrot.slane %v202, %v206
    %v225 = vunpack.c.l.b16 %v186
    %v226 = vunpack.c.l.b16 %v187
    %v227 = vunpack.c.l.b16 %v188
    %v228 = vunpack.c.l.b16 %v189
    %v229 = vunpack.c.l.b16 %v190
    %v230 = vunpack.c.l.b16 %v191
    %v231 = vunpack.c.l.b16 %v192
    %v232 = vunpack.c.l.b16 %v193
    %v233 = vunpack.c.l.b16 %v194
    %v234 = vunpack.c.l.b16 %v195
    %v235 = vunpack.c.l.b16 %v196
    %v236 = vunpack.c.l.b16 %v197
    %v237 = vunpack.c.l.b16 %v198
    %v238 = vunpack.c.l.b16 %v199
    %v239 = vunpack.c.l.b16 %v200
    %v240 = vunpack.c.l.b16 %v201
    %v241 = vpack.c.b16 %v226, %v225
    %v242 = vpack.c.b16 %v228, %v227
    %v243 = vpack.c.b16 %v230, %v229
    %v244 = vpack.c.b16 %v232, %v231
    %v245 = vpack.c.b16 %v234, %v233
    %v246 = vpack.c.b16 %v236, %v235
    %v247 = vpack.c.b16 %v238, %v237
    %v248 = vpack.c.b16 %v240, %v239
    %257 = vmatprep.subr.bf16.mxu0 0
    %258 = vmatpush1.bf16.msra.mxu0 %v241
    %259 = vmatprep.subr.bf16.mxu0 0
    %260 = vmatpush1.bf16.msra.mxu0 %v242
    %261 = vmatprep.subr.bf16.mxu0 0
    %262 = vmatpush1.bf16.msra.mxu0 %v243
    %263 = vmatprep.subr.bf16.mxu0 0
    %264 = vmatpush1.bf16.msra.mxu0 %v244
    %265 = vmatprep.subr.bf16.mxu0 0
    %266 = vmatpush1.bf16.msra.mxu0 %v245
    %267 = vmatprep.subr.bf16.mxu0 0
    %268 = vmatpush1.bf16.msra.mxu0 %v246
    %269 = vmatprep.subr.bf16.mxu0 0
    %270 = vmatpush1.bf16.msra.mxu0 %v247
    %271 = vmatprep.subr.bf16.mxu0 0
    %272 = vmatpush1.bf16.msra.mxu0 %v248
    %273 = vmatprep.subr.bf16.mxu0 0
    %274 = vmatpush1.bf16.msra.mxu0 0
    %275 = vmatprep.subr.bf16.mxu0 0
    %276 = vmatpush1.bf16.msra.mxu0 0
    %277 = vmatprep.subr.bf16.mxu0 0
    %278 = vmatpush1.bf16.msra.mxu0 0
    %279 = vmatprep.subr.bf16.mxu0 0
    %280 = vmatpush1.bf16.msra.mxu0 0
    %281 = vmatprep.subr.bf16.mxu0 0
    %282 = vmatpush1.bf16.msra.mxu0 0
    %283 = vmatprep.subr.bf16.mxu0 0
    %284 = vmatpush1.bf16.msra.mxu0 0
    %285 = vmatprep.subr.bf16.mxu0 0
    %286 = vmatpush1.bf16.msra.mxu0 0
    %287 = vmatprep.subr.bf16.mxu0 0
    %288 = vmatpush1.bf16.msra.mxu0 0
    %289 = vmatprep.mubr.bf16.mxu0 0
    %290 = vmatmul.mubr.bf16.gmra.mrb[0].mxu0 %v185
    %v291 = vpop.f32.mrb[0].mxu0
    %v292 = vadd.f32 %v207, %v291
    %v293 = vpop.f32.mrb[0].mxu0
    %v294 = vpop.f32.mrb[0].mxu0
    %v295 = vadd.f32 %v207, %v294
    %v296 = vpop.f32.mrb[0].mxu0
    %297 = vdwg.mxu0
    %298 = vst [vmem:[#allocation8] sm:$0xff] %v292
    %299 = vst [vmem:[#allocation8 + $0x8] sm:$0xff] %v295
    // Predicated region
    $region34: #{tpu_custom_call.1} parent=1 // pred_check
      _
    $region35: #{tpu_custom_call.1} parent=1 // pred_check_branch
      %301 = sbr.rel (0) target = $region37
    $region36: #{tpu_custom_call.1} parent=1 // pred_region
      %s303 = ssub.s32 256, 256
      %304 = vsyncadd [#allocation4], %s303
      %s305 = sshll.u32 [#allocation8], 4
      %s306 = int_to_ptr.vmem [resolvable:$true] %s305
      %311 = dma.vmem_to_hbm [thread:$0]  %s306, 256, %s5, [#allocation4], 128, 128, 8
    $region37: #{tpu_custom_call.1} parent=1 // pred_fallthru
      _
    // Predicated region
    $region38: #{tpu_custom_call.1} parent=1 // pred_check
      _
    $region39: #{tpu_custom_call.1} parent=1 // pred_check_branch
      %313 = sbr.rel (0) target = $region41
    $region40: #{tpu_custom_call.1} parent=1 // pred_region
      %314 = dma.done [#allocation4], 256
    $region41: #{tpu_custom_call.1} parent=1 // pred_fallthru
      _
    %315 = vsyncpa [#allocation3], 1
    %316 = vsyncpa [#allocation6], 1
    %317 = vsyncpa [#allocation4], 1

// kernel: tpu_custom_call.1
$region0: #{tpu_custom_call.1}
  #allocation0 [shape = 'u32[]', space=smem, size = 0x4, offset = 0x4, fixed_abs, tag = 'smem constant byte address 0x4 - core index']
  #allocation1 [shape = 'u32[144,128]{1,0:T(1,128)}', space=vmem, size = 0x12000, scoped, tag = 'internal scratch']
  %s0 = inlined_call_operand.hbm [shape: bf16[16,128], index: 0, kind: input, shape index: {}]
  %s1 = inlined_call_operand.hbm [shape: bf16[128,128], index: 1, kind: input, shape index: {}]
  %s2 = inlined_call_operand.vmem [shape: f32[1,128], index: 2, kind: input, shape index: {}]
  %s3 = inlined_call_operand.hbm [shape: bf16[128,128], index: 3, kind: input, shape index: {}]
  %s4 = inlined_call_operand.vmem [shape: f32[1,128], index: 4, kind: input, shape index: {}]
  %s5 = inlined_call_operand.hbm [shape: f32[16,128], index: 5, kind: output, shape index: {}]
  %s6 = sld [smem:[#allocation0]]
  $region42: #{tpu_custom_call.1} parent=0
    _
  %s8 = ssub.s32 1, %s6
  %s9 = scalar_select 0, %s8, %s6
  $region1: #{tpu_custom_call.1} parent=0
    #allocation2 [shape = 'u8[4096]{0}', space=vmem, size = 0x1000, scoped, tag = 'input window, operand 0, single buffered']
    #allocation3 [shape = 's32[1]{0}', space=sflag, size = 0x4, scoped, tag = 'scoped memory for tpu_custom_call.1']
    #allocation4 [shape = 's32[1]{0}', space=sflag, size = 0x4, scoped, tag = 'scoped memory for tpu_custom_call.1']
    #allocation5 [shape = 'u8[32768]{0}', space=vmem, size = 0x8000, scoped, tag = 'input window, operand 1, single buffered']
    #allocation6 [shape = 's32[1]{0}', space=sflag, size = 0x4, scoped, tag = 'scoped memory for tpu_custom_call.1']
    #allocation7 [shape = 'u8[32768]{0}', space=vmem, size = 0x8000, scoped, tag = 'input window, operand 3, single buffered']
    #allocation8 [shape = 'u8[8192]{0}', space=vmem, size = 0x2000, scoped, tag = 'output window, operand 0, single buffered']
    %10 = vsyncpa [#allocation3], 0
    %11 = vsyncpa [#allocation6], 0
    %12 = vsyncpa [#allocation4], 0
    // Predicated region
    $region2: #{tpu_custom_call.1} parent=1 // pred_check
      _
    $region3: #{tpu_custom_call.1} parent=1 // pred_check_branch
      %14 = sbr.rel (0) target = $region5
    $region4: #{tpu_custom_call.1} parent=1 // pred_region
      %s16 = ssub.s32 128, 128
      %17 = vsyncadd [#allocation3], %s16
      %s18 = sshll.u32 [#allocation2], 4
      %s19 = int_to_ptr.vmem [resolvable:$true] %s18
      %24 = dma.hbm_to_vmem [thread:$0]  %s0, 128, %s19, [#allocation3], 64, 64, 4
    $region5: #{tpu_custom_call.1} parent=1 // pred_fallthru
      _
    // Predicated region
    $region6: #{tpu_custom_call.1} parent=1 // pred_check
      _
    $region7: #{tpu_custom_call.1} parent=1 // pred_check_branch
      %26 = sbr.rel (0) target = $region9
    $region8: #{tpu_custom_call.1} parent=1 // pred_region
      %s28 = ssub.s32 1024, 1024
      %29 = vsyncadd [#allocation6], %s28
      %s30 = sshll.u32 [#allocation5], 4
      %s31 = int_to_ptr.vmem [resolvable:$true] %s30
      %36 = dma.hbm_to_vmem [thread:$0]  %s1, 1024, %s31, [#allocation6], 64, 64, 4
    $region9: #{tpu_custom_call.1} parent=1 // pred_fallthru
      _
    // Predicated region
    $region10: #{tpu_custom_call.1} parent=1 // pred_check
      _
    $region11: #{tpu_custom_call.1} parent=1 // pred_check_branch
      %38 = sbr.rel (0) target = $region13
    $region12: #{tpu_custom_call.1} parent=1 // pred_region
      _
    $region13: #{tpu_custom_call.1} parent=1 // pred_fallthru
      _
    // Predicated region
    $region14: #{tpu_custom_call.1} parent=1 // pred_check
      _
    $region15: #{tpu_custom_call.1} parent=1 // pred_check_branch
      %40 = sbr.rel (0) target = $region17
    $region16: #{tpu_custom_call.1} parent=1 // pred_region
      %s42 = ssub.s32 1024, 1024
      %43 = vsyncadd [#allocation6], %s42
      %s44 = sshll.u32 [#allocation7], 4
      %s45 = int_to_ptr.vmem [resolvable:$true] %s44
      %50 = dma.hbm_to_vmem [thread:$0]  %s3, 1024, %s45, [#allocation6], 64, 64, 4
    $region17: #{tpu_custom_call.1} parent=1 // pred_fallthru
      _
    // Predicated region
    $region18: #{tpu_custom_call.1} parent=1 // pred_check
      _
    $region19: #{tpu_custom_call.1} parent=1 // pred_check_branch
      %52 = sbr.rel (0) target = $region21
    $region20: #{tpu_custom_call.1} parent=1 // pred_region
      _
    $region21: #{tpu_custom_call.1} parent=1 // pred_fallthru
      _
    // Predicated region
    $region22: #{tpu_custom_call.1} parent=1 // pred_check
      _
    $region23: #{tpu_custom_call.1} parent=1 // pred_check_branch
      %54 = sbr.rel (0) target = $region25
    $region24: #{tpu_custom_call.1} parent=1 // pred_region
      %55 = dma.done [#allocation3], 128
    $region25: #{tpu_custom_call.1} parent=1 // pred_fallthru
      _
    // Predicated region
    $region26: #{tpu_custom_call.1} parent=1 // pred_check
      _
    $region27: #{tpu_custom_call.1} parent=1 // pred_check_branch
      %57 = sbr.rel (0) target = $region29
    $region28: #{tpu_custom_call.1} parent=1 // pred_region
      %58 = dma.done [#allocation6], 1024
    $region29: #{tpu_custom_call.1} parent=1 // pred_fallthru
      _
    // Predicated region
    $region30: #{tpu_custom_call.1} parent=1 // pred_check
      _
    $region31: #{tpu_custom_call.1} parent=1 // pred_check_branch
      %60 = sbr.rel (0) target = $region33
    $region32: #{tpu_custom_call.1} parent=1 // pred_region
      %61 = dma.done [#allocation6], 1024
    $region33: #{tpu_custom_call.1} parent=1 // pred_fallthru
      _
    %v63 = vld [vmem:[#allocation2] sm:$0xf]
    %v64 = vld [vmem:[#allocation2 + $0x4] sm:$0xf]
    %v65 = vld [vmem:[#allocation5] sm:$0xf]
    %v66 = vld [vmem:[#allocation5 + $0x4] sm:$0xf]
    %v67 = vld [vmem:[#allocation5 + $0x8] sm:$0xf]
    %v68 = vld [vmem:[#allocation5 + $0xc] sm:$0xf]
    %v69 = vld [vmem:[#allocation5 + $0x10] sm:$0xf]
    %v70 = vld [vmem:[#allocation5 + $0x14] sm:$0xf]
    %v71 = vld [vmem:[#allocation5 + $0x18] sm:$0xf]
    %v72 = vld [vmem:[#allocation5 + $0x1c] sm:$0xf]
    %v73 = vld [vmem:[#allocation5 + $0x20] sm:$0xf]
    %v74 = vld [vmem:[#allocation5 + $0x24] sm:$0xf]
    %v75 = vld [vmem:[#allocation5 + $0x28] sm:$0xf]
    %v76 = vld [vmem:[#allocation5 + $0x2c] sm:$0xf]
    %v77 = vld [vmem:[#allocation5 + $0x30] sm:$0xf]
    %v78 = vld [vmem:[#allocation5 + $0x34] sm:$0xf]
    %v79 = vld [vmem:[#allocation5 + $0x38] sm:$0xf]
    %v80 = vld [vmem:[#allocation5 + $0x3c] sm:$0xf]
    %v81 = vld [vmem:[%s2] sm:$0x1]
    %v83 = vlaneseq
    %v84 = vshrl.u32 %v83, 7
    %v85 = vsub.s32 0, %v84
    %v86 = vrot.slane %v81, %v85
    %v90 = vunpack.c.l.b16 %v63
    %v91 = vunpack.c.l.b16 %v64
    %v92 = vpack.c.b16 %v91, %v90
    %v110 = vunpack.c.l.b16 %v65
    %v111 = vunpack.c.l.b16 %v66
    %v112 = vunpack.c.l.b16 %v67
    %v113 = vunpack.c.l.b16 %v68
    %v114 = vunpack.c.l.b16 %v69
    %v115 = vunpack.c.l.b16 %v70
    %v116 = vunpack.c.l.b16 %v71
    %v117 = vunpack.c.l.b16 %v72
    %v118 = vunpack.c.l.b16 %v73
    %v119 = vunpack.c.l.b16 %v74
    %v120 = vunpack.c.l.b16 %v75
    %v121 = vunpack.c.l.b16 %v76
    %v122 = vunpack.c.l.b16 %v77
    %v123 = vunpack.c.l.b16 %v78
    %v124 = vunpack.c.l.b16 %v79
    %v125 = vunpack.c.l.b16 %v80
    %v126 = vpack.c.b16 %v111, %v110
    %v127 = vpack.c.b16 %v113, %v112
    %v128 = vpack.c.b16 %v115, %v114
    %v129 = vpack.c.b16 %v117, %v116
    %v130 = vpack.c.b16 %v119, %v118
    %v131 = vpack.c.b16 %v121, %v120
    %v132 = vpack.c.b16 %v123, %v122
    %v133 = vpack.c.b16 %v125, %v124
    %142 = vmatprep.subr.bf16.mxu0 0
    %143 = vmatpush1.bf16.msra.mxu0 %v126
    %144 = vmatprep.subr.bf16.mxu0 0
    %145 = vmatpush1.bf16.msra.mxu0 %v127
    %146 = vmatprep.subr.bf16.mxu0 0
    %147 = vmatpush1.bf16.msra.mxu0 %v128
    %148 = vmatprep.subr.bf16.mxu0 0
    %149 = vmatpush1.bf16.msra.mxu0 %v129
    %150 = vmatprep.subr.bf16.mxu0 0
    %151 = vmatpush1.bf16.msra.mxu0 %v130
    %152 = vmatprep.subr.bf16.mxu0 0
    %153 = vmatpush1.bf16.msra.mxu0 %v131
    %154 = vmatprep.subr.bf16.mxu0 0
    %155 = vmatpush1.bf16.msra.mxu0 %v132
    %156 = vmatprep.subr.bf16.mxu0 0
    %157 = vmatpush1.bf16.msra.mxu0 %v133
    %158 = vmatprep.subr.bf16.mxu0 0
    %159 = vmatpush1.bf16.msra.mxu0 0
    %160 = vmatprep.subr.bf16.mxu0 0
    %161 = vmatpush1.bf16.msra.mxu0 0
    %162 = vmatprep.subr.bf16.mxu0 0
    %163 = vmatpush1.bf16.msra.mxu0 0
    %164 = vmatprep.subr.bf16.mxu0 0
    %165 = vmatpush1.bf16.msra.mxu0 0
    %166 = vmatprep.subr.bf16.mxu0 0
    %167 = vmatpush1.bf16.msra.mxu0 0
    %168 = vmatprep.subr.bf16.mxu0 0
    %169 = vmatpush1.bf16.msra.mxu0 0
    %170 = vmatprep.subr.bf16.mxu0 0
    %171 = vmatpush1.bf16.msra.mxu0 0
    %172 = vmatprep.subr.bf16.mxu0 0
    %173 = vmatpush1.bf16.msra.mxu0 0
    %174 = vmatprep.mubr.bf16.mxu0 0
    %175 = vmatmul.mubr.bf16.gmra.mrb[0].mxu0 %v92
    %v176 = vpop.f32.mrb[0].mxu0
    %v177 = vadd.f32 %v86, %v176
    %v178 = vpop.f32.mrb[0].mxu0
    %v179 = vpop.f32.mrb[0].mxu0
    %v180 = vadd.f32 %v86, %v179
    %v181 = vpop.f32.mrb[0].mxu0
    %182 = vdwg.mxu0
    %v183 = vmax.f32 %v177, 0.0
    %v184 = vmax.f32 %v180, 0.0
    %v185 = vpack.c.bf16 %v184, %v183
    %v186 = vld [vmem:[#allocation7] sm:$0xf]
    %v187 = vld [vmem:[#allocation7 + $0x4] sm:$0xf]
    %v188 = vld [vmem:[#allocation7 + $0x8] sm:$0xf]
    %v189 = vld [vmem:[#allocation7 + $0xc] sm:$0xf]
    %v190 = vld [vmem:[#allocation7 + $0x10] sm:$0xf]
    %v191 = vld [vmem:[#allocation7 + $0x14] sm:$0xf]
    %v192 = vld [vmem:[#allocation7 + $0x18] sm:$0xf]
    %v193 = vld [vmem:[#allocation7 + $0x1c] sm:$0xf]
    %v194 = vld [vmem:[#allocation7 + $0x20] sm:$0xf]
    %v195 = vld [vmem:[#allocation7 + $0x24] sm:$0xf]
    %v196 = vld [vmem:[#allocation7 + $0x28] sm:$0xf]
    %v197 = vld [vmem:[#allocation7 + $0x2c] sm:$0xf]
    %v198 = vld [vmem:[#allocation7 + $0x30] sm:$0xf]
    %v199 = vld [vmem:[#allocation7 + $0x34] sm:$0xf]
    %v200 = vld [vmem:[#allocation7 + $0x38] sm:$0xf]
    %v201 = vld [vmem:[#allocation7 + $0x3c] sm:$0xf]
    %v202 = vld [vmem:[%s4] sm:$0x1]
    %v204 = vlaneseq
    %v205 = vshrl.u32 %v204, 7
    %v206 = vsub.s32 0, %v205
    %v207 = vrot.slane %v202, %v206
    %v225 = vunpack.c.l.b16 %v186
    %v226 = vunpack.c.l.b16 %v187
    %v227 = vunpack.c.l.b16 %v188
    %v228 = vunpack.c.l.b16 %v189
    %v229 = vunpack.c.l.b16 %v190
    %v230 = vunpack.c.l.b16 %v191
    %v231 = vunpack.c.l.b16 %v192
    %v232 = vunpack.c.l.b16 %v193
    %v233 = vunpack.c.l.b16 %v194
    %v234 = vunpack.c.l.b16 %v195
    %v235 = vunpack.c.l.b16 %v196
    %v236 = vunpack.c.l.b16 %v197
    %v237 = vunpack.c.l.b16 %v198
    %v238 = vunpack.c.l.b16 %v199
    %v239 = vunpack.c.l.b16 %v200
    %v240 = vunpack.c.l.b16 %v201
    %v241 = vpack.c.b16 %v226, %v225
    %v242 = vpack.c.b16 %v228, %v227
    %v243 = vpack.c.b16 %v230, %v229
    %v244 = vpack.c.b16 %v232, %v231
    %v245 = vpack.c.b16 %v234, %v233
    %v246 = vpack.c.b16 %v236, %v235
    %v247 = vpack.c.b16 %v238, %v237
    %v248 = vpack.c.b16 %v240, %v239
    %257 = vmatprep.subr.bf16.mxu0 0
    %258 = vmatpush1.bf16.msra.mxu0 %v241
    %259 = vmatprep.subr.bf16.mxu0 0
    %260 = vmatpush1.bf16.msra.mxu0 %v242
    %261 = vmatprep.subr.bf16.mxu0 0
    %262 = vmatpush1.bf16.msra.mxu0 %v243
    %263 = vmatprep.subr.bf16.mxu0 0
    %264 = vmatpush1.bf16.msra.mxu0 %v244
    %265 = vmatprep.subr.bf16.mxu0 0
    %266 = vmatpush1.bf16.msra.mxu0 %v245
    %267 = vmatprep.subr.bf16.mxu0 0
    %268 = vmatpush1.bf16.msra.mxu0 %v246
    %269 = vmatprep.subr.bf16.mxu0 0
    %270 = vmatpush1.bf16.msra.mxu0 %v247
    %271 = vmatprep.subr.bf16.mxu0 0
    %272 = vmatpush1.bf16.msra.mxu0 %v248
    %273 = vmatprep.subr.bf16.mxu0 0
    %274 = vmatpush1.bf16.msra.mxu0 0
    %275 = vmatprep.subr.bf16.mxu0 0
    %276 = vmatpush1.bf16.msra.mxu0 0
    %277 = vmatprep.subr.bf16.mxu0 0
    %278 = vmatpush1.bf16.msra.mxu0 0
    %279 = vmatprep.subr.bf16.mxu0 0
    %280 = vmatpush1.bf16.msra.mxu0 0
    %281 = vmatprep.subr.bf16.mxu0 0
    %282 = vmatpush1.bf16.msra.mxu0 0
    %283 = vmatprep.subr.bf16.mxu0 0
    %284 = vmatpush1.bf16.msra.mxu0 0
    %285 = vmatprep.subr.bf16.mxu0 0
    %286 = vmatpush1.bf16.msra.mxu0 0
    %287 = vmatprep.subr.bf16.mxu0 0
    %288 = vmatpush1.bf16.msra.mxu0 0
    %289 = vmatprep.mubr.bf16.mxu0 0
    %290 = vmatmul.mubr.bf16.gmra.mrb[0].mxu0 %v185
    %v291 = vpop.f32.mrb[0].mxu0
    %v292 = vadd.f32 %v207, %v291
    %v293 = vpop.f32.mrb[0].mxu0
    %v294 = vpop.f32.mrb[0].mxu0
    %v295 = vadd.f32 %v207, %v294
    %v296 = vpop.f32.mrb[0].mxu0
    %297 = vdwg.mxu0
    %298 = vst [vmem:[#allocation8] sm:$0xff] %v292
    %299 = vst [vmem:[#allocation8 + $0x8] sm:$0xff] %v295
    // Predicated region
    $region34: #{tpu_custom_call.1} parent=1 // pred_check
      _
    $region35: #{tpu_custom_call.1} parent=1 // pred_check_branch
      %301 = sbr.rel (0) target = $region37
    $region36: #{tpu_custom_call.1} parent=1 // pred_region
      %s303 = ssub.s32 256, 256
      %304 = vsyncadd [#allocation4], %s303
      %s305 = sshll.u32 [#allocation8], 4
      %s306 = int_to_ptr.vmem [resolvable:$true] %s305
      %311 = dma.vmem_to_hbm [thread:$0]  %s306, 256, %s5, [#allocation4], 128, 128, 8
    $region37: #{tpu_custom_call.1} parent=1 // pred_fallthru
      _
    // Predicated region
    $region38: #{tpu_custom_call.1} parent=1 // pred_check
      _
    $region39: #{tpu_custom_call.1} parent=1 // pred_check_branch
      %313 = sbr.rel (0) target = $region41
    $region40: #{tpu_custom_call.1} parent=1 // pred_region
      %314 = dma.done [#allocation4], 256
    $region41: #{tpu_custom_call.1} parent=1 // pred_fallthru
      _
    %315 = vsyncpa [#allocation3], 1
    %316 = vsyncpa [#allocation6], 1
    %317 = vsyncpa [#allocation4], 1

</llo_original>
